<compile_context>
chip_gen: v7x
topology: tpu7x:2x2x1
jax: 0.10.0
libtpu: 0.0.40
codegen_flags: <defaults>
</compile_context>

<pallas_src>
import jax
import jax.numpy as jnp
from jax.experimental import pallas as pl
from jax.experimental.pallas import tpu as pltpu

LN_EPS = 1e-5


def _length_regulator_kernel(xp_ref,
                             w1_ref, b1_ref, g1_ref, be1_ref,
                             w2_ref, b2_ref, g2_ref, be2_ref,
                             lw_ref, lb_ref,
                             o_ref):
    Bb, Tp, H = xp_ref.shape          # xp is 'same'-padded along time
    T = o_ref.shape[1]
    K = Tp - T + 1
    pad_l = (K - 1) // 2
    pad_r = (K - 1) - pad_l

    def conv_im2col(hp, w_ref):
        # hp: (Bb, T+K-1, H) bf16 (already 'same'-padded); w_ref: (K*H, H) bf16
        cols = jnp.concatenate([hp[:, k:k + T, :] for k in range(K)], axis=-1)
        return jnp.dot(cols.reshape(Bb * T, K * H), w_ref[...],
                       preferred_element_type=jnp.float32)      # (Bb*T, H) f32

    def bias_ln_relu(y, b_ref, g_ref, be_ref):
        # Elementwise / LayerNorm math stays in f32 (v5e has no bf16 VPU).
        y = y + b_ref[...]
        mu = jnp.mean(y, axis=-1, keepdims=True)
        var = jnp.mean(jnp.square(y - mu), axis=-1, keepdims=True)
        y = (y - mu) * jax.lax.rsqrt(var + LN_EPS) * g_ref[...] + be_ref[...]
        return jnp.maximum(y, 0.0)

    # conv1 (+ bias) -> LN -> ReLU
    h = bias_ln_relu(conv_im2col(xp_ref[...], w1_ref), b1_ref, g1_ref, be1_ref)
    # TODO(synk): Dropout is identity at inference; not modeled in-kernel.

    # conv2 (+ bias) -> LN -> ReLU  (pad the intermediate along time in-kernel)
    hp2 = jnp.pad(h.astype(jnp.bfloat16).reshape(Bb, T, H),
                  ((0, 0), (pad_l, pad_r), (0, 0)))
    h = bias_ln_relu(conv_im2col(hp2, w2_ref), b2_ref, g2_ref, be2_ref)

    # Linear(H, 1) as VPU multiply + lane reduction (avoids a width-1 MXU
    # matmul and masked width-1 stores), then ReLU and exp, lane-dense write.
    d = jnp.sum(h.reshape(Bb, T, H) * lw_ref[...], axis=-1)      # (Bb, T)
    d = jnp.maximum(d + lb_ref[0], 0.0)
    o_ref[...] = jnp.exp(d)


def _choose_block_b(B, T, target_rows=256):
    """Largest divisor of B whose Bb*T is <= ~256 MXU rows (else B itself)."""
    want = max(1, -(-target_rows // T))       # ceil(target_rows / T)
    best = 1
    for d in range(1, B + 1):
        if B % d == 0 and d <= want:
            best = d
    return best


def length_regulator_forward(x, params, *, block_b=None):
    """x: (B, T, H) f32 -> durations (B, T) f32."""
    x = jnp.asarray(x, jnp.float32)
    B, T, H = x.shape
    K = params["w1"].shape[0]
    pad_l = (K - 1) // 2
    pad_r = (K - 1) - pad_l
    Tp = T + K - 1

    if block_b is None:
        block_b = _choose_block_b(B, T)
    assert B % block_b == 0, "block_b must divide B"
    grid_b = B // block_b

    # bf16 MXU inputs (accumulation in f32 inside the kernel).
    xp = jnp.pad(x, ((0, 0), (pad_l, pad_r), (0, 0))).astype(jnp.bfloat16)
    w1 = params["w1"].reshape(K * H, H).astype(jnp.bfloat16)
    w2 = params["w2"].reshape(K * H, H).astype(jnp.bfloat16)
    f32 = lambda a: jnp.asarray(a, jnp.float32)

    const = lambda shape: pl.BlockSpec(shape, lambda b: (0,) * len(shape))

    out = pl.pallas_call(
        _length_regulator_kernel,
        out_shape=jax.ShapeDtypeStruct((B, T), jnp.float32),
        grid_spec=pltpu.PrefetchScalarGridSpec(
            num_scalar_prefetch=0,
            grid=(grid_b,),
            in_specs=[
                pl.BlockSpec((block_b, Tp, H), lambda b: (b, 0, 0)),   # x (padded)
                const((K * H, H)),                                      # conv1 w
                const((1, H)), const((1, H)), const((1, H)),            # b1, g1, be1
                const((K * H, H)),                                      # conv2 w
                const((1, H)), const((1, H)), const((1, H)),            # b2, g2, be2
                const((1, H)),                                          # linear w (row)
                pl.BlockSpec(memory_space=pltpu.MemorySpace.SMEM),      # linear b (scalar)
            ],
            out_specs=pl.BlockSpec((block_b, T), lambda b: (b, 0)),
        ),
        compiler_params=pltpu.CompilerParams(
            dimension_semantics=("parallel",),
            vmem_limit_bytes=32 * 1024 * 1024),
    )(xp, w1,
      f32(params["b1"]), f32(params["g1"]), f32(params["be1"]),
      w2,
      f32(params["b2"]), f32(params["g2"]), f32(params["be2"]),
      f32(params["lw"]), f32(params["lb"]).reshape(1))
    return out                                                   # (B, T), lane-dense


def init_params(key, hidden_size, kernel_size):
    """Deterministic synthetic parameters (shapes match the nn module)."""
    H, K = hidden_size, kernel_size
    ks = jax.random.split(key, 6)
    scale_c = 1.0 / jnp.sqrt(H * K)
    scale_l = 1.0 / jnp.sqrt(H)
    # Conv weights stored per-tap as (K, H_in, H_out) == torch_weight[:, :, k].T
    return {
        "w1": jax.random.uniform(ks[0], (K, H, H), jnp.float32, -scale_c, scale_c),
        "b1": jax.random.uniform(ks[1], (1, H), jnp.float32, -scale_c, scale_c),
        "g1": jnp.ones((1, H), jnp.float32),
        "be1": jnp.zeros((1, H), jnp.float32),
        "w2": jax.random.uniform(ks[2], (K, H, H), jnp.float32, -scale_c, scale_c),
        "b2": jax.random.uniform(ks[3], (1, H), jnp.float32, -scale_c, scale_c),
        "g2": jnp.ones((1, H), jnp.float32),
        "be2": jnp.zeros((1, H), jnp.float32),
        # torch Linear(H, 1) weight is (1, H); kept as a lane-broadcast row.
        "lw": jax.random.uniform(ks[4], (1, H), jnp.float32, -scale_l, scale_l),
        "lb": jax.random.uniform(ks[5], (1,), jnp.float32, -scale_l, scale_l),
    }


def _reference_forward(x, p):
    """Pure-JAX reference (same bf16-input / f32-accumulate precision choices)."""
    K = p["w1"].shape[0]
    pad_l = (K - 1) // 2
    pad_r = (K - 1) - pad_l

    def conv_same(h, w, b):                      # w: (K, H_in, H_out)
        hp = jnp.pad(h.astype(jnp.bfloat16), ((0, 0), (pad_l, pad_r), (0, 0)))
        y = sum(jnp.einsum("btd,de->bte", hp[:, k:k + h.shape[1], :],
                           w[k].astype(jnp.bfloat16),
                           preferred_element_type=jnp.float32)
                for k in range(K))
        return y + p_cast(b)

    def p_cast(a):
        return jnp.asarray(a, jnp.float32)

    def ln(h, g, be):
        mu = jnp.mean(h, -1, keepdims=True)
        var = jnp.mean((h - mu) ** 2, -1, keepdims=True)
        return (h - mu) * jax.lax.rsqrt(var + LN_EPS) * p_cast(g) + p_cast(be)

    h = jnp.maximum(ln(conv_same(x, p["w1"], p["b1"]), p["g1"], p["be1"]), 0.0)
    h = jnp.maximum(ln(conv_same(h, p["w2"], p["b2"]), p["g2"], p["be2"]), 0.0)
    d = jnp.sum(h * p_cast(p["lw"]), axis=-1) + p_cast(p["lb"])[0]
    return jnp.exp(jnp.maximum(d, 0.0))          # (B, T)


if __name__ == "__main__":
    B, T, H, K = 2, 16, 32, 3
    key = jax.random.PRNGKey(0)
    k_x, k_p = jax.random.split(key)
    x = jax.random.normal(k_x, (B, T, H), jnp.float32)
    params = init_params(k_p, H, K)

    durations = jax.block_until_ready(length_regulator_forward(x, params))
    ref = _reference_forward(x, params)

    assert durations.shape == (B, T)
    max_err = jnp.max(jnp.abs(durations - ref))
    assert jnp.allclose(durations, ref, atol=2e-2, rtol=2e-2), (
        f"max abs err {max_err}")
    print("KERNEL_OK")
</pallas_src>

<mosaic_0001>
module attributes {stable_mosaic.version = 11 : i64} {
  func.func @_length_regulator_kernel(%arg0: i32, %arg1: memref<2x18x32xbf16, #tpu.memory_space<vmem>>, %arg2: memref<96x32xbf16, #tpu.memory_space<vmem>>, %arg3: memref<1x32xf32, #tpu.memory_space<vmem>>, %arg4: memref<1x32xf32, #tpu.memory_space<vmem>>, %arg5: memref<1x32xf32, #tpu.memory_space<vmem>>, %arg6: memref<96x32xbf16, #tpu.memory_space<vmem>>, %arg7: memref<1x32xf32, #tpu.memory_space<vmem>>, %arg8: memref<1x32xf32, #tpu.memory_space<vmem>>, %arg9: memref<1x32xf32, #tpu.memory_space<vmem>>, %arg10: memref<1x32xf32, #tpu.memory_space<vmem>>, %arg11: memref<1xf32, #tpu.memory_space<smem>>, %arg12: memref<2x16xf32, #tpu.memory_space<vmem>>) attributes {dimension_semantics = [#tpu.dimension_semantics<parallel>], iteration_bounds = array<i64: 1>, scalar_prefetch = 0 : i64, scratch_operands = 0 : i64, tpu.core_type = #tpu.core_type<tc>, window_params = [{transform_indices = @transform_0, window_bounds = array<i64: 2, 18, 32>}, {pipeline_mode = #tpu.pipeline_mode<synchronous>, transform_indices = @transform_1, window_bounds = array<i64: 96, 32>}, {pipeline_mode = #tpu.pipeline_mode<synchronous>, transform_indices = @transform_2, window_bounds = array<i64: 1, 32>}, {pipeline_mode = #tpu.pipeline_mode<synchronous>, transform_indices = @transform_3, window_bounds = array<i64: 1, 32>}, {pipeline_mode = #tpu.pipeline_mode<synchronous>, transform_indices = @transform_4, window_bounds = array<i64: 1, 32>}, {pipeline_mode = #tpu.pipeline_mode<synchronous>, transform_indices = @transform_5, window_bounds = array<i64: 96, 32>}, {pipeline_mode = #tpu.pipeline_mode<synchronous>, transform_indices = @transform_6, window_bounds = array<i64: 1, 32>}, {pipeline_mode = #tpu.pipeline_mode<synchronous>, transform_indices = @transform_7, window_bounds = array<i64: 1, 32>}, {pipeline_mode = #tpu.pipeline_mode<synchronous>, transform_indices = @transform_8, window_bounds = array<i64: 1, 32>}, {pipeline_mode = #tpu.pipeline_mode<synchronous>, transform_indices = @transform_9, window_bounds = array<i64: 1, 32>}, {transform_indices = @transform_10, window_bounds = array<i64: 1>}, {transform_indices = @transform_11, window_bounds = array<i64: 2, 16>}]} {
    %c0 = arith.constant 0 : index
    %c0_0 = arith.constant 0 : index
    %c0_1 = arith.constant 0 : index
    %0 = vector.load %arg1[%c0, %c0_0, %c0_1] : memref<2x18x32xbf16, #tpu.memory_space<vmem>>, vector<2x18x32xbf16>
    %1 = vector.extract_strided_slice %0 {offsets = [0, 0, 0], sizes = [2, 16, 32], strides = [1, 1, 1]} : vector<2x18x32xbf16> to vector<2x16x32xbf16>
    %2 = vector.extract_strided_slice %0 {offsets = [0, 1, 0], sizes = [2, 16, 32], strides = [1, 1, 1]} : vector<2x18x32xbf16> to vector<2x16x32xbf16>
    %3 = vector.extract_strided_slice %0 {offsets = [0, 2, 0], sizes = [2, 16, 32], strides = [1, 1, 1]} : vector<2x18x32xbf16> to vector<2x16x32xbf16>
    %4 = tpu.concatenate %1, %2, %3 in 2 : vector<2x16x32xbf16>, vector<2x16x32xbf16>, vector<2x16x32xbf16> -> vector<2x16x96xbf16>
    %5 = vector.shape_cast %4 : vector<2x16x96xbf16> to vector<32x96xbf16>
    %c0_2 = arith.constant 0 : index
    %c0_3 = arith.constant 0 : index
    %6 = vector.load %arg2[%c0_2, %c0_3] : memref<96x32xbf16, #tpu.memory_space<vmem>>, vector<96x32xbf16>
    %cst = arith.constant dense<0.000000e+00> : vector<32x32xf32>
    %7 = tpu.matmul %5, %6, %cst {dimension_numbers = #tpu.dot_dimension_numbers<[1], [0], [0], [1], [0, 0, 1, 1], [], []>} : vector<32x96xbf16>, vector<96x32xbf16>, vector<32x32xf32> -> vector<32x32xf32>
    %c0_4 = arith.constant 0 : index
    %c0_5 = arith.constant 0 : index
    %8 = vector.load %arg3[%c0_4, %c0_5] : memref<1x32xf32, #tpu.memory_space<vmem>>, vector<1x32xf32>
    %9 = vector.broadcast %8 : vector<1x32xf32> to vector<32x32xf32>
    %10 = arith.addf %7, %9 : vector<32x32xf32>
    %cst_6 = arith.constant dense<0.000000e+00> : vector<32xf32>
    %11 = vector.multi_reduction <add>, %10, %cst_6 [1] : vector<32x32xf32> to vector<32xf32>
    %12 = vector.shape_cast %11 : vector<32xf32> to vector<32x1xf32>
    %cst_7 = arith.constant 3.200000e+01 : f32
    %13 = vector.broadcast %cst_7 : f32 to vector<32x1xf32>
    %14 = arith.divf %12, %13 : vector<32x1xf32>
    %15 = vector.broadcast %14 : vector<32x1xf32> to vector<32x32xf32>
    %16 = arith.subf %10, %15 : vector<32x32xf32>
    %17 = arith.mulf %16, %16 : vector<32x32xf32>
    %cst_8 = arith.constant dense<0.000000e+00> : vector<32xf32>
    %18 = vector.multi_reduction <add>, %17, %cst_8 [1] : vector<32x32xf32> to vector<32xf32>
    %19 = vector.shape_cast %18 : vector<32xf32> to vector<32x1xf32>
    %cst_9 = arith.constant 3.200000e+01 : f32
    %20 = vector.broadcast %cst_9 : f32 to vector<32x1xf32>
    %21 = arith.divf %19, %20 : vector<32x1xf32>
    %22 = vector.broadcast %14 : vector<32x1xf32> to vector<32x32xf32>
    %23 = arith.subf %10, %22 : vector<32x32xf32>
    %cst_10 = arith.constant 9.99999974E-6 : f32
    %24 = vector.broadcast %cst_10 : f32 to vector<32x1xf32>
    %25 = arith.addf %21, %24 : vector<32x1xf32>
    %26 = math.rsqrt %25 : vector<32x1xf32>
    %27 = vector.broadcast %26 : vector<32x1xf32> to vector<32x32xf32>
    %28 = arith.mulf %23, %27 : vector<32x32xf32>
    %c0_11 = arith.constant 0 : index
    %c0_12 = arith.constant 0 : index
    %29 = vector.load %arg4[%c0_11, %c0_12] : memref<1x32xf32, #tpu.memory_space<vmem>>, vector<1x32xf32>
    %30 = vector.broadcast %29 : vector<1x32xf32> to vector<32x32xf32>
    %31 = arith.mulf %28, %30 : vector<32x32xf32>
    %c0_13 = arith.constant 0 : index
    %c0_14 = arith.constant 0 : index
    %32 = vector.load %arg5[%c0_13, %c0_14] : memref<1x32xf32, #tpu.memory_space<vmem>>, vector<1x32xf32>
    %33 = vector.broadcast %32 : vector<1x32xf32> to vector<32x32xf32>
    %34 = arith.addf %31, %33 : vector<32x32xf32>
    %cst_15 = arith.constant 0.000000e+00 : f32
    %35 = vector.broadcast %cst_15 : f32 to vector<32x32xf32>
    %36 = arith.maximumf %34, %35 : vector<32x32xf32>
    %37 = arith.truncf %36 : vector<32x32xf32> to vector<32x32xbf16>
    %38 = vector.shape_cast %37 : vector<32x32xbf16> to vector<2x16x32xbf16>
    %c0_i32 = arith.constant 0 : i32
    %39 = arith.sitofp %c0_i32 : i32 to bf16
    %40 = vector.broadcast %39 : bf16 to vector<2x1x32xbf16>
    %41 = tpu.concatenate %40, %38 in 1 : vector<2x1x32xbf16>, vector<2x16x32xbf16> -> vector<2x17x32xbf16>
    %42 = vector.broadcast %39 : bf16 to vector<2x1x32xbf16>
    %43 = tpu.concatenate %41, %42 in 1 : vector<2x17x32xbf16>, vector<2x1x32xbf16> -> vector<2x18x32xbf16>
    %44 = vector.extract_strided_slice %43 {offsets = [0, 0, 0], sizes = [2, 16, 32], strides = [1, 1, 1]} : vector<2x18x32xbf16> to vector<2x16x32xbf16>
    %45 = vector.extract_strided_slice %43 {offsets = [0, 1, 0], sizes = [2, 16, 32], strides = [1, 1, 1]} : vector<2x18x32xbf16> to vector<2x16x32xbf16>
    %46 = vector.extract_strided_slice %43 {offsets = [0, 2, 0], sizes = [2, 16, 32], strides = [1, 1, 1]} : vector<2x18x32xbf16> to vector<2x16x32xbf16>
    %47 = tpu.concatenate %44, %45, %46 in 2 : vector<2x16x32xbf16>, vector<2x16x32xbf16>, vector<2x16x32xbf16> -> vector<2x16x96xbf16>
    %48 = vector.shape_cast %47 : vector<2x16x96xbf16> to vector<32x96xbf16>
    %c0_16 = arith.constant 0 : index
    %c0_17 = arith.constant 0 : index
    %49 = vector.load %arg6[%c0_16, %c0_17] : memref<96x32xbf16, #tpu.memory_space<vmem>>, vector<96x32xbf16>
    %cst_18 = arith.constant dense<0.000000e+00> : vector<32x32xf32>
    %50 = tpu.matmul %48, %49, %cst_18 {dimension_numbers = #tpu.dot_dimension_numbers<[1], [0], [0], [1], [0, 0, 1, 1], [], []>} : vector<32x96xbf16>, vector<96x32xbf16>, vector<32x32xf32> -> vector<32x32xf32>
    %c0_19 = arith.constant 0 : index
    %c0_20 = arith.constant 0 : index
    %51 = vector.load %arg7[%c0_19, %c0_20] : memref<1x32xf32, #tpu.memory_space<vmem>>, vector<1x32xf32>
    %52 = vector.broadcast %51 : vector<1x32xf32> to vector<32x32xf32>
    %53 = arith.addf %50, %52 : vector<32x32xf32>
    %cst_21 = arith.constant dense<0.000000e+00> : vector<32xf32>
    %54 = vector.multi_reduction <add>, %53, %cst_21 [1] : vector<32x32xf32> to vector<32xf32>
    %55 = vector.shape_cast %54 : vector<32xf32> to vector<32x1xf32>
    %cst_22 = arith.constant 3.200000e+01 : f32
    %56 = vector.broadcast %cst_22 : f32 to vector<32x1xf32>
    %57 = arith.divf %55, %56 : vector<32x1xf32>
    %58 = vector.broadcast %57 : vector<32x1xf32> to vector<32x32xf32>
    %59 = arith.subf %53, %58 : vector<32x32xf32>
    %60 = arith.mulf %59, %59 : vector<32x32xf32>
    %cst_23 = arith.constant dense<0.000000e+00> : vector<32xf32>
    %61 = vector.multi_reduction <add>, %60, %cst_23 [1] : vector<32x32xf32> to vector<32xf32>
    %62 = vector.shape_cast %61 : vector<32xf32> to vector<32x1xf32>
    %cst_24 = arith.constant 3.200000e+01 : f32
    %63 = vector.broadcast %cst_24 : f32 to vector<32x1xf32>
    %64 = arith.divf %62, %63 : vector<32x1xf32>
    %65 = vector.broadcast %57 : vector<32x1xf32> to vector<32x32xf32>
    %66 = arith.subf %53, %65 : vector<32x32xf32>
    %cst_25 = arith.constant 9.99999974E-6 : f32
    %67 = vector.broadcast %cst_25 : f32 to vector<32x1xf32>
    %68 = arith.addf %64, %67 : vector<32x1xf32>
    %69 = math.rsqrt %68 : vector<32x1xf32>
    %70 = vector.broadcast %69 : vector<32x1xf32> to vector<32x32xf32>
    %71 = arith.mulf %66, %70 : vector<32x32xf32>
    %c0_26 = arith.constant 0 : index
    %c0_27 = arith.constant 0 : index
    %72 = vector.load %arg8[%c0_26, %c0_27] : memref<1x32xf32, #tpu.memory_space<vmem>>, vector<1x32xf32>
    %73 = vector.broadcast %72 : vector<1x32xf32> to vector<32x32xf32>
    %74 = arith.mulf %71, %73 : vector<32x32xf32>
    %c0_28 = arith.constant 0 : index
    %c0_29 = arith.constant 0 : index
    %75 = vector.load %arg9[%c0_28, %c0_29] : memref<1x32xf32, #tpu.memory_space<vmem>>, vector<1x32xf32>
    %76 = vector.broadcast %75 : vector<1x32xf32> to vector<32x32xf32>
    %77 = arith.addf %74, %76 : vector<32x32xf32>
    %cst_30 = arith.constant 0.000000e+00 : f32
    %78 = vector.broadcast %cst_30 : f32 to vector<32x32xf32>
    %79 = arith.maximumf %77, %78 : vector<32x32xf32>
    %80 = vector.shape_cast %79 : vector<32x32xf32> to vector<2x16x32xf32>
    %c0_31 = arith.constant 0 : index
    %c0_32 = arith.constant 0 : index
    %81 = vector.load %arg10[%c0_31, %c0_32] : memref<1x32xf32, #tpu.memory_space<vmem>>, vector<1x32xf32>
    %82 = vector.shape_cast %81 : vector<1x32xf32> to vector<1x1x32xf32>
    %83 = vector.broadcast %82 : vector<1x1x32xf32> to vector<2x16x32xf32>
    %84 = arith.mulf %80, %83 : vector<2x16x32xf32>
    %cst_33 = arith.constant dense<0.000000e+00> : vector<2x16xf32>
    %85 = vector.multi_reduction <add>, %84, %cst_33 [2] : vector<2x16x32xf32> to vector<2x16xf32>
    %c0_34 = arith.constant 0 : index
    %86 = memref.load %arg11[%c0_34] : memref<1xf32, #tpu.memory_space<smem>>
    %87 = vector.broadcast %86 : f32 to vector<2x16xf32>
    %88 = arith.addf %85, %87 : vector<2x16xf32>
    %cst_35 = arith.constant 0.000000e+00 : f32
    %89 = vector.broadcast %cst_35 : f32 to vector<2x16xf32>
    %90 = arith.maximumf %88, %89 : vector<2x16xf32>
    %91 = math.exp %90 : vector<2x16xf32>
    %c0_36 = arith.constant 0 : index
    %c0_37 = arith.constant 0 : index
    %92 = vector.load %arg12[%c0_36, %c0_37] : memref<2x16xf32, #tpu.memory_space<vmem>>, vector<2x16xf32>
    tpu.vector_store %arg12[%c0_36, %c0_37], %91 {strides = array<i32>} : memref<2x16xf32, #tpu.memory_space<vmem>>, vector<2x16xf32>,
    return
  }
  func.func @transform_0(%arg0: i32) -> (i32, i32, i32) {
    %c0_i32 = arith.constant 0 : i32
    %c0_i32_0 = arith.constant 0 : i32
    %c0_i32_1 = arith.constant 0 : i32
    return %arg0, %c0_i32, %c0_i32_0 : i32, i32, i32
  }
  func.func @transform_1(%arg0: i32) -> (i32, i32) {
    %c0_i32 = arith.constant 0 : i32
    %c0_i32_0 = arith.constant 0 : i32
    %c0_i32_1 = arith.constant 0 : i32
    return %c0_i32, %c0_i32_0 : i32, i32
  }
  func.func @transform_2(%arg0: i32) -> (i32, i32) {
    %c0_i32 = arith.constant 0 : i32
    %c0_i32_0 = arith.constant 0 : i32
    %c0_i32_1 = arith.constant 0 : i32
    return %c0_i32, %c0_i32_0 : i32, i32
  }
  func.func @transform_3(%arg0: i32) -> (i32, i32) {
    %c0_i32 = arith.constant 0 : i32
    %c0_i32_0 = arith.constant 0 : i32
    %c0_i32_1 = arith.constant 0 : i32
    return %c0_i32, %c0_i32_0 : i32, i32
  }
  func.func @transform_4(%arg0: i32) -> (i32, i32) {
    %c0_i32 = arith.constant 0 : i32
    %c0_i32_0 = arith.constant 0 : i32
    %c0_i32_1 = arith.constant 0 : i32
    return %c0_i32, %c0_i32_0 : i32, i32
  }
  func.func @transform_5(%arg0: i32) -> (i32, i32) {
    %c0_i32 = arith.constant 0 : i32
    %c0_i32_0 = arith.constant 0 : i32
    %c0_i32_1 = arith.constant 0 : i32
    return %c0_i32, %c0_i32_0 : i32, i32
  }
  func.func @transform_6(%arg0: i32) -> (i32, i32) {
    %c0_i32 = arith.constant 0 : i32
    %c0_i32_0 = arith.constant 0 : i32
    %c0_i32_1 = arith.constant 0 : i32
    return %c0_i32, %c0_i32_0 : i32, i32
  }
  func.func @transform_7(%arg0: i32) -> (i32, i32) {
    %c0_i32 = arith.constant 0 : i32
    %c0_i32_0 = arith.constant 0 : i32
    %c0_i32_1 = arith.constant 0 : i32
    return %c0_i32, %c0_i32_0 : i32, i32
  }
  func.func @transform_8(%arg0: i32) -> (i32, i32) {
    %c0_i32 = arith.constant 0 : i32
    %c0_i32_0 = arith.constant 0 : i32
    %c0_i32_1 = arith.constant 0 : i32
    return %c0_i32, %c0_i32_0 : i32, i32
  }
  func.func @transform_9(%arg0: i32) -> (i32, i32) {
    %c0_i32 = arith.constant 0 : i32
    %c0_i32_0 = arith.constant 0 : i32
    %c0_i32_1 = arith.constant 0 : i32
    return %c0_i32, %c0_i32_0 : i32, i32
  }
  func.func @transform_10(%arg0: i32) -> i32 {
    %c0_i32 = arith.constant 0 : i32
    %c0_i32_0 = arith.constant 0 : i32
    return %c0_i32 : i32
  }
  func.func @transform_11(%arg0: i32) -> (i32, i32) {
    %c0_i32 = arith.constant 0 : i32
    %c0_i32_0 = arith.constant 0 : i32
    return %arg0, %c0_i32 : i32, i32
  }
}

</mosaic_0001>

<llo_original>
// kernel: tpu_custom_call.1
$region0: #{tpu_custom_call.1}
  #allocation0 [shape = 'u32[]', space=smem, size = 0x4, offset = 0x4, fixed_abs, tag = 'smem constant byte address 0x4 - core index']
  #allocation1 [shape = 'u32[144,128]{1,0:T(1,128)}', space=vmem, size = 0x12000, scoped, tag = 'internal scratch']
  #allocation2 [shape = 'f32[1]{0:T(128)S(6)}', space=smem, size = 0x200, scoped, tag = 'scoped memory for tpu_custom_call.1']
  %s0 = inlined_call_operand.vmem [shape: bf16[2,18,32], index: 0, kind: input, shape index: {}]
  %s1 = inlined_call_operand.vmem [shape: bf16[96,32], index: 1, kind: input, shape index: {}]
  %s2 = inlined_call_operand.vmem [shape: f32[1,32], index: 2, kind: input, shape index: {}]
  %s3 = inlined_call_operand.vmem [shape: f32[1,32], index: 3, kind: input, shape index: {}]
  %s4 = inlined_call_operand.vmem [shape: f32[1,32], index: 4, kind: input, shape index: {}]
  %s5 = inlined_call_operand.vmem [shape: bf16[96,32], index: 5, kind: input, shape index: {}]
  %s6 = inlined_call_operand.vmem [shape: f32[1,32], index: 6, kind: input, shape index: {}]
  %s7 = inlined_call_operand.vmem [shape: f32[1,32], index: 7, kind: input, shape index: {}]
  %s8 = inlined_call_operand.vmem [shape: f32[1,32], index: 8, kind: input, shape index: {}]
  %s9 = inlined_call_operand.vmem [shape: f32[1,32], index: 9, kind: input, shape index: {}]
  %s10 = inlined_call_operand.<no memory space> [shape: f32[1], index: 10, kind: input, shape index: {}]
  %s11 = inlined_call_operand.hbm [shape: f32[2,16], index: 11, kind: output, shape index: {}]
  %s12 = sld [smem:[#allocation0]]
  $region54: #{tpu_custom_call.1} parent=0
    _
  %s14 = ssub.s32 1, %s12
  %s15 = scalar_select 0, %s14, %s12
  %16 = sst [smem:[#allocation2]] %s10
  $region1: #{tpu_custom_call.1} parent=0
    #allocation3 [shape = 'u8[1024]{0}', space=vmem, size = 0x400, scoped, tag = 'output window, operand 0, single buffered']
    #allocation4 [shape = 's32[1]{0}', space=sflag, size = 0x4, scoped, tag = 'scoped memory for tpu_custom_call.1']
    %17 = vsyncpa [#allocation4], 0
    // Predicated region
    $region2: #{tpu_custom_call.1} parent=1 // pred_check
      _
    $region3: #{tpu_custom_call.1} parent=1 // pred_check_branch
      %19 = sbr.rel (0) target = $region5
    $region4: #{tpu_custom_call.1} parent=1 // pred_region
      _
    $region5: #{tpu_custom_call.1} parent=1 // pred_fallthru
      _
    // Predicated region
    $region6: #{tpu_custom_call.1} parent=1 // pred_check
      _
    $region7: #{tpu_custom_call.1} parent=1 // pred_check_branch
      %21 = sbr.rel (0) target = $region9
    $region8: #{tpu_custom_call.1} parent=1 // pred_region
      _
    $region9: #{tpu_custom_call.1} parent=1 // pred_fallthru
      _
    // Predicated region
    $region10: #{tpu_custom_call.1} parent=1 // pred_check
      _
    $region11: #{tpu_custom_call.1} parent=1 // pred_check_branch
      %23 = sbr.rel (0) target = $region13
    $region12: #{tpu_custom_call.1} parent=1 // pred_region
      _
    $region13: #{tpu_custom_call.1} parent=1 // pred_fallthru
      _
    // Predicated region
    $region14: #{tpu_custom_call.1} parent=1 // pred_check
      _
    $region15: #{tpu_custom_call.1} parent=1 // pred_check_branch
      %25 = sbr.rel (0) target = $region17
    $region16: #{tpu_custom_call.1} parent=1 // pred_region
      _
    $region17: #{tpu_custom_call.1} parent=1 // pred_fallthru
      _
    // Predicated region
    $region18: #{tpu_custom_call.1} parent=1 // pred_check
      _
    $region19: #{tpu_custom_call.1} parent=1 // pred_check_branch
      %27 = sbr.rel (0) target = $region21
    $region20: #{tpu_custom_call.1} parent=1 // pred_region
      _
    $region21: #{tpu_custom_call.1} parent=1 // pred_fallthru
      _
    // Predicated region
    $region22: #{tpu_custom_call.1} parent=1 // pred_check
      _
    $region23: #{tpu_custom_call.1} parent=1 // pred_check_branch
      %29 = sbr.rel (0) target = $region25
    $region24: #{tpu_custom_call.1} parent=1 // pred_region
      _
    $region25: #{tpu_custom_call.1} parent=1 // pred_fallthru
      _
    // Predicated region
    $region26: #{tpu_custom_call.1} parent=1 // pred_check
      _
    $region27: #{tpu_custom_call.1} parent=1 // pred_check_branch
      %31 = sbr.rel (0) target = $region29
    $region28: #{tpu_custom_call.1} parent=1 // pred_region
      _
    $region29: #{tpu_custom_call.1} parent=1 // pred_fallthru
      _
    // Predicated region
    $region30: #{tpu_custom_call.1} parent=1 // pred_check
      _
    $region31: #{tpu_custom_call.1} parent=1 // pred_check_branch
      %33 = sbr.rel (0) target = $region33
    $region32: #{tpu_custom_call.1} parent=1 // pred_region
      _
    $region33: #{tpu_custom_call.1} parent=1 // pred_fallthru
      _
    // Predicated region
    $region34: #{tpu_custom_call.1} parent=1 // pred_check
      _
    $region35: #{tpu_custom_call.1} parent=1 // pred_check_branch
      %35 = sbr.rel (0) target = $region37
    $region36: #{tpu_custom_call.1} parent=1 // pred_region
      _
    $region37: #{tpu_custom_call.1} parent=1 // pred_fallthru
      _
    // Predicated region
    $region38: #{tpu_custom_call.1} parent=1 // pred_check
      _
    $region39: #{tpu_custom_call.1} parent=1 // pred_check_branch
      %37 = sbr.rel (0) target = $region41
    $region40: #{tpu_custom_call.1} parent=1 // pred_region
      _
    $region41: #{tpu_custom_call.1} parent=1 // pred_fallthru
      _
    // Predicated region
    $region42: #{tpu_custom_call.1} parent=1 // pred_check
      _
    $region43: #{tpu_custom_call.1} parent=1 // pred_check_branch
      %39 = sbr.rel (0) target = $region45
    $region44: #{tpu_custom_call.1} parent=1 // pred_region
      _
    $region45: #{tpu_custom_call.1} parent=1 // pred_fallthru
      _
    %v41 = vld [vmem:[%s0] sm:$0xf]
    %v42 = vld [vmem:[%s0 + $0x4] sm:$0xf]
    %v43 = vld [vmem:[%s0 + $0x8] sm:$0x1]
    %v44 = vld [vmem:[%s0 + $0xc] sm:$0xf]
    %v45 = vld [vmem:[%s0 + $0x10] sm:$0xf]
    %v46 = vld [vmem:[%s0 + $0x14] sm:$0x1]
    %v51 = vunpack.c.l.b16 %v41
    %v52 = vunpack.c.l.b16 %v42
    %v53 = vunpack.c.l.b16 %v44
    %v54 = vunpack.c.l.b16 %v45
    %v55 = vpack.c.b16 %v52, %v51
    %v56 = vpack.c.b16 %v54, %v53
    %v59 = vunpack.c.l.b16 %v43
    %v60 = vunpack.c.l.b16 %v46
    %v61 = vpack.c.b16 %v59, %v59
    %v62 = vpack.c.b16 %v60, %v60
    %vm63 = vsmask.f32 7424
    %v65 = vshrl.u32 %v55, 16
    %v67 = vshll.u32 %v55, 16
    %v69 = vrot.slane %v67, 1
    %v70 = vor.u32 %v65, %v69
    %v72 = vshll.u32 %v61, 16
    %v74 = vrot.slane %v72, 1
    %v75 = vsel %vm63, %v70, %v74
    %v77 = vshrl.u32 %v56, 16
    %v79 = vshll.u32 %v56, 16
    %v81 = vrot.slane %v79, 1
    %v82 = vor.u32 %v77, %v81
    %v84 = vshll.u32 %v62, 16
    %v86 = vrot.slane %v84, 1
    %v87 = vsel %vm63, %v82, %v86
    %88 = vrot.lane.b32.xlu0 %v75, 32
    %v89 = vpop.permute.xlu0 %88
    %90 = vrot.lane.b32.xlu0 %v87, 32
    %v91 = vpop.permute.xlu0 %90
    %vm92 = vcmask 1046528
    %v93 = vrot.slane %v55, 1
    %v94 = vrot.slane %v61, 1
    %v95 = vsel %vm92, %v93, %v94
    %v96 = vrot.slane %v56, 1
    %v97 = vrot.slane %v62, 1
    %v98 = vsel %vm92, %v96, %v97
    %99 = vrot.lane.b32.xlu0 %v95, 64
    %v100 = vpop.permute.xlu0 %99
    %101 = vrot.lane.b32.xlu0 %v98, 64
    %v102 = vpop.permute.xlu0 %101
    %vm103 = vcmask 261120
    %v105 = vsel %vm103, %v55, %v89
    %v107 = vsel %vm103, %v56, %v91
    %vm108 = vcmask 523264
    %v110 = vsel %vm108, %v105, %v100
    %v112 = vsel %vm108, %v107, %v102
    %v113 = vld [vmem:[%s1] sm:$0xf]
    %v114 = vld [vmem:[%s1 + $0x4] sm:$0xf]
    %v115 = vld [vmem:[%s1 + $0x8] sm:$0xf]
    %v116 = vld [vmem:[%s1 + $0xc] sm:$0xf]
    %v117 = vld [vmem:[%s1 + $0x10] sm:$0xf]
    %v118 = vld [vmem:[%s1 + $0x14] sm:$0xf]
    %v119 = vld [vmem:[%s1 + $0x18] sm:$0xf]
    %v120 = vld [vmem:[%s1 + $0x1c] sm:$0xf]
    %v121 = vld [vmem:[%s1 + $0x20] sm:$0xf]
    %v122 = vld [vmem:[%s1 + $0x24] sm:$0xf]
    %v123 = vld [vmem:[%s1 + $0x28] sm:$0xf]
    %v124 = vld [vmem:[%s1 + $0x2c] sm:$0xf]
    %v125 = vld [vmem:[%s2] sm:$0x1]
    %v127 = vlaneseq
    %v128 = vshrl.u32 %v127, 7
    %v129 = vsub.s32 0, %v128
    %v130 = vrot.slane %v125, %v129
    %v144 = vunpack.c.l.b16 %v113
    %v145 = vunpack.c.l.b16 %v114
    %v146 = vunpack.c.l.b16 %v115
    %v147 = vunpack.c.l.b16 %v116
    %v148 = vunpack.c.l.b16 %v117
    %v149 = vunpack.c.l.b16 %v118
    %v150 = vunpack.c.l.b16 %v119
    %v151 = vunpack.c.l.b16 %v120
    %v152 = vunpack.c.l.b16 %v121
    %v153 = vunpack.c.l.b16 %v122
    %v154 = vunpack.c.l.b16 %v123
    %v155 = vunpack.c.l.b16 %v124
    %v156 = vpack.c.b16 %v145, %v144
    %v157 = vpack.c.b16 %v147, %v146
    %v158 = vpack.c.b16 %v149, %v148
    %v159 = vpack.c.b16 %v151, %v150
    %v160 = vpack.c.b16 %v153, %v152
    %v161 = vpack.c.b16 %v155, %v154
    %vm168 = vcmask 785408
    %v169 = vsel %vm168, %v110, 0
    %v171 = vsel %vm168, %v112, 0
    %173 = vmatprep.subr.bf16.mxu0 0
    %174 = vmatpush1.bf16.msra.mxu0 %v156
    %175 = vmatprep.subr.bf16.mxu0 0
    %176 = vmatpush1.bf16.msra.mxu0 %v157
    %177 = vmatprep.subr.bf16.mxu0 0
    %178 = vmatpush1.bf16.msra.mxu0 %v158
    %179 = vmatprep.subr.bf16.mxu0 0
    %180 = vmatpush1.bf16.msra.mxu0 %v159
    %181 = vmatprep.subr.bf16.mxu0 0
    %182 = vmatpush1.bf16.msra.mxu0 %v160
    %183 = vmatprep.subr.bf16.mxu0 0
    %184 = vmatpush1.bf16.msra.mxu0 %v161
    %185 = vmatprep.subr.bf16.mxu0 0
    %186 = vmatpush1.bf16.msra.mxu0 0
    %187 = vmatprep.subr.bf16.mxu0 0
    %188 = vmatpush1.bf16.msra.mxu0 0
    %189 = vmatprep.subr.bf16.mxu0 0
    %190 = vmatpush1.bf16.msra.mxu0 0
    %191 = vmatprep.subr.bf16.mxu0 0
    %192 = vmatpush1.bf16.msra.mxu0 0
    %193 = vmatprep.subr.bf16.mxu0 0
    %194 = vmatpush1.bf16.msra.mxu0 0
    %195 = vmatprep.subr.bf16.mxu0 0
    %196 = vmatpush1.bf16.msra.mxu0 0
    %197 = vmatprep.subr.bf16.mxu0 0
    %198 = vmatpush1.bf16.msra.mxu0 0
    %199 = vmatprep.subr.bf16.mxu0 0
    %200 = vmatpush1.bf16.msra.mxu0 0
    %201 = vmatprep.subr.bf16.mxu0 0
    %202 = vmatpush1.bf16.msra.mxu0 0
    %203 = vmatprep.subr.bf16.mxu0 0
    %204 = vmatpush1.bf16.msra.mxu0 0
    %205 = vmatprep.mubr.bf16.mxu0 0
    %206 = vmatmul.mubr.bf16.gmra.mrb[0].mxu0 %v169
    %v207 = vpop.f32.mrb[0].mxu0
    %v208 = vadd.f32 %v130, %v207
    %v209 = vpop.f32.mrb[0].mxu0
    %v210 = vpop.f32.mrb[0].mxu0
    %v211 = vadd.f32 %v130, %v210
    %v212 = vpop.f32.mrb[0].mxu0
    %213 = vmatprep.mubr.bf16.mxu0 0
    %214 = vmatmul.mubr.bf16.gmra.mrb[0].mxu0 %v171
    %v215 = vpop.f32.mrb[0].mxu0
    %v216 = vadd.f32 %v130, %v215
    %v217 = vpop.f32.mrb[0].mxu0
    %v218 = vpop.f32.mrb[0].mxu0
    %v219 = vadd.f32 %v130, %v218
    %v220 = vpop.f32.mrb[0].mxu0
    %221 = vdwg.mxu0
    %v222 = vsel %vm103, %v208, 0.0
    %223 = vadd.xlane.f32.xlu0 %v222
    %v224 = vpop.xlane.xlu0 %223
    %v225 = vsel %vm103, %v211, 0.0
    %226 = vadd.xlane.f32.xlu0 %v225
    %v227 = vpop.xlane.xlu0 %226
    %v228 = vsel %vm103, %v216, 0.0
    %229 = vadd.xlane.f32.xlu0 %v228
    %v230 = vpop.xlane.xlu0 %229
    %v231 = vsel %vm103, %v219, 0.0
    %232 = vadd.xlane.f32.xlu0 %v231
    %v233 = vpop.xlane.xlu0 %232
    %v234 = vrcp.pop 32.0
    %v235 = vmul.f32 %v224, %v234
    %v236 = vmul.f32 %v227, %v234
    %v237 = vmul.f32 %v230, %v234
    %v238 = vmul.f32 %v233, %v234
    %v239 = vsub.f32 %v208, %v235
    %v240 = vsub.f32 %v211, %v236
    %v241 = vsub.f32 %v216, %v237
    %v242 = vsub.f32 %v219, %v238
    %v243 = vmul.f32 %v239, %v239
    %v244 = vmul.f32 %v240, %v240
    %v245 = vmul.f32 %v241, %v241
    %v246 = vmul.f32 %v242, %v242
    %v247 = vsel %vm103, %v243, 0.0
    %248 = vadd.xlane.f32.xlu0 %v247
    %v249 = vpop.xlane.xlu0 %248
    %v250 = vsel %vm103, %v244, 0.0
    %251 = vadd.xlane.f32.xlu0 %v250
    %v252 = vpop.xlane.xlu0 %251
    %v253 = vsel %vm103, %v245, 0.0
    %254 = vadd.xlane.f32.xlu0 %v253
    %v255 = vpop.xlane.xlu0 %254
    %v256 = vsel %vm103, %v246, 0.0
    %257 = vadd.xlane.f32.xlu0 %v256
    %v258 = vpop.xlane.xlu0 %257
    %v259 = vmul.f32 %v249, %v234
    %v260 = vmul.f32 %v252, %v234
    %v261 = vmul.f32 %v255, %v234
    %v262 = vmul.f32 %v258, %v234
    %v263 = vadd.f32 %v259, 1e-05
    %v264 = vadd.f32 %v260, 1e-05
    %v265 = vadd.f32 %v261, 1e-05
    %v266 = vadd.f32 %v262, 1e-05
    %v267 = vrsqrt.pop %v263
    %v268 = vrsqrt.pop %v264
    %v269 = vrsqrt.pop %v265
    %v270 = vrsqrt.pop %v266
    %v271 = vmul.f32 %v239, %v267
    %v272 = vmul.f32 %v240, %v268
    %v273 = vmul.f32 %v241, %v269
    %v274 = vmul.f32 %v242, %v270
    %v275 = vld [vmem:[%s3] sm:$0x1]
    %v277 = vlaneseq
    %v278 = vshrl.u32 %v277, 7
    %v279 = vsub.s32 0, %v278
    %v280 = vrot.slane %v275, %v279
    %v282 = vmul.f32 %v271, %v280
    %v283 = vmul.f32 %v272, %v280
    %v284 = vmul.f32 %v273, %v280
    %v285 = vmul.f32 %v274, %v280
    %v286 = vld [vmem:[%s4] sm:$0x1]
    %v288 = vlaneseq
    %v289 = vshrl.u32 %v288, 7
    %v290 = vsub.s32 0, %v289
    %v291 = vrot.slane %v286, %v290
    %v293 = vadd.f32 %v282, %v291
    %v294 = vadd.f32 %v283, %v291
    %v295 = vadd.f32 %v284, %v291
    %v296 = vadd.f32 %v285, %v291
    %v297 = vmax.f32 %v293, 0.0
    %v298 = vmax.f32 %v294, 0.0
    %v299 = vmax.f32 %v295, 0.0
    %v300 = vmax.f32 %v296, 0.0
    %v301 = vpack.c.bf16 %v298, %v297
    %v302 = vpack.c.bf16 %v300, %v299
    %v304 = vshrl.u32 %v301, 16
    %v306 = vrot.slane %v304, 7
    %v307 = vshll.u32 %v301, 16
    %v309 = vor.u32 %v306, %v307
    %v311 = vshrl.u32 %v302, 16
    %v313 = vrot.slane %v311, 7
    %v314 = vshll.u32 %v302, 16
    %v316 = vor.u32 %v313, %v314
    %vm321 = vcmask 1040384
    %vm322 = vsmask.f32 256
    %vm323 = vmand %vm321, %vm322
    %v324 = vsel %vm323, 0, %v309
    %v325 = vsel %vm323, 0, %v316
    %v326 = vsel %vm323, %v306, 0
    %v327 = vsel %vm323, %v313, 0
    %v329 = vshrl.u32 %v324, 16
    %v331 = vshll.u32 %v324, 16
    %v333 = vrot.slane %v331, 1
    %v334 = vor.u32 %v329, %v333
    %v336 = vshll.u32 %v326, 16
    %v338 = vrot.slane %v336, 1
    %v339 = vsel %vm63, %v334, %v338
    %v341 = vshrl.u32 %v325, 16
    %v343 = vshll.u32 %v325, 16
    %v345 = vrot.slane %v343, 1
    %v346 = vor.u32 %v341, %v345
    %v348 = vshll.u32 %v327, 16
    %v350 = vrot.slane %v348, 1
    %v351 = vsel %vm63, %v346, %v350
    %352 = vrot.lane.b32.xlu0 %v339, 32
    %v353 = vpop.permute.xlu0 %352
    %354 = vrot.lane.b32.xlu0 %v351, 32
    %v355 = vpop.permute.xlu0 %354
    %v360 = vrot.slane %v324, 1
    %v361 = vrot.slane %v326, 1
    %v362 = vsel %vm92, %v360, %v361
    %v363 = vrot.slane %v325, 1
    %v364 = vrot.slane %v327, 1
    %v365 = vsel %vm92, %v363, %v364
    %366 = vrot.lane.b32.xlu0 %v362, 64
    %v367 = vpop.permute.xlu0 %366
    %368 = vrot.lane.b32.xlu0 %v365, 64
    %v369 = vpop.permute.xlu0 %368
    %v371 = vsel %vm103, %v324, %v353
    %v373 = vsel %vm103, %v325, %v355
    %v375 = vsel %vm108, %v371, %v367
    %v377 = vsel %vm108, %v373, %v369
    %v378 = vld [vmem:[%s5] sm:$0xf]
    %v379 = vld [vmem:[%s5 + $0x4] sm:$0xf]
    %v380 = vld [vmem:[%s5 + $0x8] sm:$0xf]
    %v381 = vld [vmem:[%s5 + $0xc] sm:$0xf]
    %v382 = vld [vmem:[%s5 + $0x10] sm:$0xf]
    %v383 = vld [vmem:[%s5 + $0x14] sm:$0xf]
    %v384 = vld [vmem:[%s5 + $0x18] sm:$0xf]
    %v385 = vld [vmem:[%s5 + $0x1c] sm:$0xf]
    %v386 = vld [vmem:[%s5 + $0x20] sm:$0xf]
    %v387 = vld [vmem:[%s5 + $0x24] sm:$0xf]
    %v388 = vld [vmem:[%s5 + $0x28] sm:$0xf]
    %v389 = vld [vmem:[%s5 + $0x2c] sm:$0xf]
    %v390 = vld [vmem:[%s6] sm:$0x1]
    %v392 = vlaneseq
    %v393 = vshrl.u32 %v392, 7
    %v394 = vsub.s32 0, %v393
    %v395 = vrot.slane %v390, %v394
    %v409 = vunpack.c.l.b16 %v378
    %v410 = vunpack.c.l.b16 %v379
    %v411 = vunpack.c.l.b16 %v380
    %v412 = vunpack.c.l.b16 %v381
    %v413 = vunpack.c.l.b16 %v382
    %v414 = vunpack.c.l.b16 %v383
    %v415 = vunpack.c.l.b16 %v384
    %v416 = vunpack.c.l.b16 %v385
    %v417 = vunpack.c.l.b16 %v386
    %v418 = vunpack.c.l.b16 %v387
    %v419 = vunpack.c.l.b16 %v388
    %v420 = vunpack.c.l.b16 %v389
    %v421 = vpack.c.b16 %v410, %v409
    %v422 = vpack.c.b16 %v412, %v411
    %v423 = vpack.c.b16 %v414, %v413
    %v424 = vpack.c.b16 %v416, %v415
    %v425 = vpack.c.b16 %v418, %v417
    %v426 = vpack.c.b16 %v420, %v419
    %v433 = vsel %vm168, %v375, 0
    %v435 = vsel %vm168, %v377, 0
    %437 = vmatprep.subr.bf16.mxu0 0
    %438 = vmatpush1.bf16.msra.mxu0 %v421
    %439 = vmatprep.subr.bf16.mxu0 0
    %440 = vmatpush1.bf16.msra.mxu0 %v422
    %441 = vmatprep.subr.bf16.mxu0 0
    %442 = vmatpush1.bf16.msra.mxu0 %v423
    %443 = vmatprep.subr.bf16.mxu0 0
    %444 = vmatpush1.bf16.msra.mxu0 %v424
    %445 = vmatprep.subr.bf16.mxu0 0
    %446 = vmatpush1.bf16.msra.mxu0 %v425
    %447 = vmatprep.subr.bf16.mxu0 0
    %448 = vmatpush1.bf16.msra.mxu0 %v426
    %449 = vmatprep.subr.bf16.mxu0 0
    %450 = vmatpush1.bf16.msra.mxu0 0
    %451 = vmatprep.subr.bf16.mxu0 0
    %452 = vmatpush1.bf16.msra.mxu0 0
    %453 = vmatprep.subr.bf16.mxu0 0
    %454 = vmatpush1.bf16.msra.mxu0 0
    %455 = vmatprep.subr.bf16.mxu0 0
    %456 = vmatpush1.bf16.msra.mxu0 0
    %457 = vmatprep.subr.bf16.mxu0 0
    %458 = vmatpush1.bf16.msra.mxu0 0
    %459 = vmatprep.subr.bf16.mxu0 0
    %460 = vmatpush1.bf16.msra.mxu0 0
    %461 = vmatprep.subr.bf16.mxu0 0
    %462 = vmatpush1.bf16.msra.mxu0 0
    %463 = vmatprep.subr.bf16.mxu0 0
    %464 = vmatpush1.bf16.msra.mxu0 0
    %465 = vmatprep.subr.bf16.mxu0 0
    %466 = vmatpush1.bf16.msra.mxu0 0
    %467 = vmatprep.subr.bf16.mxu0 0
    %468 = vmatpush1.bf16.msra.mxu0 0
    %469 = vmatprep.mubr.bf16.mxu0 0
    %470 = vmatmul.mubr.bf16.gmra.mrb[0].mxu0 %v433
    %v471 = vpop.f32.mrb[0].mxu0
    %v472 = vadd.f32 %v395, %v471
    %v473 = vpop.f32.mrb[0].mxu0
    %v474 = vpop.f32.mrb[0].mxu0
    %v475 = vadd.f32 %v395, %v474
    %v476 = vpop.f32.mrb[0].mxu0
    %477 = vmatprep.mubr.bf16.mxu0 0
    %478 = vmatmul.mubr.bf16.gmra.mrb[0].mxu0 %v435
    %v479 = vpop.f32.mrb[0].mxu0
    %v480 = vadd.f32 %v395, %v479
    %v481 = vpop.f32.mrb[0].mxu0
    %v482 = vpop.f32.mrb[0].mxu0
    %v483 = vadd.f32 %v395, %v482
    %v484 = vpop.f32.mrb[0].mxu0
    %485 = vdwg.mxu0
    %v486 = vsel %vm103, %v472, 0.0
    %487 = vadd.xlane.f32.xlu0 %v486
    %v488 = vpop.xlane.xlu0 %487
    %v489 = vsel %vm103, %v475, 0.0
    %490 = vadd.xlane.f32.xlu0 %v489
    %v491 = vpop.xlane.xlu0 %490
    %v492 = vsel %vm103, %v480, 0.0
    %493 = vadd.xlane.f32.xlu0 %v492
    %v494 = vpop.xlane.xlu0 %493
    %v495 = vsel %vm103, %v483, 0.0
    %496 = vadd.xlane.f32.xlu0 %v495
    %v497 = vpop.xlane.xlu0 %496
    %v498 = vmul.f32 %v488, %v234
    %v499 = vmul.f32 %v491, %v234
    %v500 = vmul.f32 %v494, %v234
    %v501 = vmul.f32 %v497, %v234
    %v502 = vsub.f32 %v472, %v498
    %v503 = vsub.f32 %v475, %v499
    %v504 = vsub.f32 %v480, %v500
    %v505 = vsub.f32 %v483, %v501
    %v506 = vmul.f32 %v502, %v502
    %v507 = vmul.f32 %v503, %v503
    %v508 = vmul.f32 %v504, %v504
    %v509 = vmul.f32 %v505, %v505
    %v510 = vsel %vm103, %v506, 0.0
    %511 = vadd.xlane.f32.xlu0 %v510
    %v512 = vpop.xlane.xlu0 %511
    %v513 = vsel %vm103, %v507, 0.0
    %514 = vadd.xlane.f32.xlu0 %v513
    %v515 = vpop.xlane.xlu0 %514
    %v516 = vsel %vm103, %v508, 0.0
    %517 = vadd.xlane.f32.xlu0 %v516
    %v518 = vpop.xlane.xlu0 %517
    %v519 = vsel %vm103, %v509, 0.0
    %520 = vadd.xlane.f32.xlu0 %v519
    %v521 = vpop.xlane.xlu0 %520
    %v522 = vmul.f32 %v512, %v234
    %v523 = vmul.f32 %v515, %v234
    %v524 = vmul.f32 %v518, %v234
    %v525 = vmul.f32 %v521, %v234
    %v526 = vadd.f32 %v522, 1e-05
    %v527 = vadd.f32 %v523, 1e-05
    %v528 = vadd.f32 %v524, 1e-05
    %v529 = vadd.f32 %v525, 1e-05
    %v530 = vrsqrt.pop %v526
    %v531 = vrsqrt.pop %v527
    %v532 = vrsqrt.pop %v528
    %v533 = vrsqrt.pop %v529
    %v534 = vmul.f32 %v502, %v530
    %v535 = vmul.f32 %v503, %v531
    %v536 = vmul.f32 %v504, %v532
    %v537 = vmul.f32 %v505, %v533
    %v538 = vld [vmem:[%s7] sm:$0x1]
    %v540 = vlaneseq
    %v541 = vshrl.u32 %v540, 7
    %v542 = vsub.s32 0, %v541
    %v543 = vrot.slane %v538, %v542
    %v545 = vmul.f32 %v534, %v543
    %v546 = vmul.f32 %v535, %v543
    %v547 = vmul.f32 %v536, %v543
    %v548 = vmul.f32 %v537, %v543
    %v549 = vld [vmem:[%s8] sm:$0x1]
    %v551 = vlaneseq
    %v552 = vshrl.u32 %v551, 7
    %v553 = vsub.s32 0, %v552
    %v554 = vrot.slane %v549, %v553
    %v556 = vadd.f32 %v545, %v554
    %v557 = vadd.f32 %v546, %v554
    %v558 = vadd.f32 %v547, %v554
    %v559 = vadd.f32 %v548, %v554
    %v560 = vmax.f32 %v556, 0.0
    %v561 = vmax.f32 %v557, 0.0
    %v562 = vmax.f32 %v558, 0.0
    %v563 = vmax.f32 %v559, 0.0
    %v564 = vld [vmem:[%s9] sm:$0x1]
    %v566 = vlaneseq
    %v567 = vshrl.u32 %v566, 7
    %v568 = vsub.s32 0, %v567
    %v569 = vrot.slane %v564, %v568
    %v571 = vmul.f32 %v560, %v569
    %v572 = vmul.f32 %v561, %v569
    %v573 = vmul.f32 %v562, %v569
    %v574 = vmul.f32 %v563, %v569
    %v575 = vsel %vm103, %v571, 0.0
    %576 = vadd.xlane.f32.xlu0 %v575
    %v577 = vpop.xlane.xlu0 %576
    %v578 = vsel %vm103, %v572, 0.0
    %579 = vadd.xlane.f32.xlu0 %v578
    %v580 = vpop.xlane.xlu0 %579
    %v581 = vsel %vm103, %v573, 0.0
    %582 = vadd.xlane.f32.xlu0 %v581
    %v583 = vpop.xlane.xlu0 %582
    %v584 = vsel %vm103, %v574, 0.0
    %585 = vadd.xlane.f32.xlu0 %v584
    %v586 = vpop.xlane.xlu0 %585
    %s587 = sld [smem:[#allocation2]]
    %v588 = vstv %s587
    %v589 = vadd.f32 %v577, %v588
    %v590 = vadd.f32 %v580, %v588
    %v591 = vadd.f32 %v583, %v588
    %v592 = vadd.f32 %v586, %v588
    %v593 = vmax.f32 %v589, 0.0
    %v594 = vmax.f32 %v590, 0.0
    %v595 = vmax.f32 %v591, 0.0
    %v596 = vmax.f32 %v592, 0.0
    %v597 = vmul.f32 %v593, 1.442695
    %v598 = vpow.pop %v597
    %v599 = vmul.f32 %v594, 1.442695
    %v600 = vpow.pop %v599
    %v601 = vmul.f32 %v595, 1.442695
    %v602 = vpow.pop %v601
    %v603 = vmul.f32 %v596, 1.442695
    %v604 = vpow.pop %v603
    %v609 = vlaneseq
    %v610 = vand.u32 %v609, 127
    %v611 = vlaneseq
    %v612 = vshrl.u32 %v611, 7
    %v613 = vsub.s32 %v610, %v612
    %v614 = vrot.slane %v598, %v613
    %v615 = vadd.s32 %v610, 4294967288
    %v616 = vlaneseq
    %v617 = vshrl.u32 %v616, 7
    %v618 = vsub.s32 %v615, %v617
    %v619 = vrot.slane %v600, %v618
    %vm620 = vcmask 130112
    %v621 = vsel %vm620, %v619, %v614
    %v622 = vlaneseq
    %v623 = vshrl.u32 %v622, 7
    %v624 = vsub.s32 %v610, %v623
    %v625 = vrot.slane %v602, %v624
    %v626 = vlaneseq
    %v627 = vshrl.u32 %v626, 7
    %v628 = vsub.s32 %v615, %v627
    %v629 = vrot.slane %v604, %v628
    %v630 = vsel %vm620, %v629, %v625
    %vm631 = vcmask 1041409
    %v632 = vsel %vm631, %v630, %v621
    %vm634 = vcmask 123904
    %635 = vst.msk [vmem:[#allocation3] sm:$0x3] %vm634, %v632
    // Predicated region
    $region46: #{tpu_custom_call.1} parent=1 // pred_check
      _
    $region47: #{tpu_custom_call.1} parent=1 // pred_check_branch
      %637 = sbr.rel (0) target = $region49
    $region48: #{tpu_custom_call.1} parent=1 // pred_region
      %s639 = ssub.s32 32, 32
      %640 = vsyncadd [#allocation4], %s639
      %s642 = sshll.u32 [#allocation3], 4
      %s643 = int_to_ptr.vmem [resolvable:$true] %s642
      %645 = dma.vmem_to_hbm [thread:$0]  %s643, 32, %s11, [#allocation4]
    $region49: #{tpu_custom_call.1} parent=1 // pred_fallthru
      _
    // Predicated region
    $region50: #{tpu_custom_call.1} parent=1 // pred_check
      _
    $region51: #{tpu_custom_call.1} parent=1 // pred_check_branch
      %647 = sbr.rel (0) target = $region53
    $region52: #{tpu_custom_call.1} parent=1 // pred_region
      %648 = dma.done [#allocation4], 32
    $region53: #{tpu_custom_call.1} parent=1 // pred_fallthru
      _
    %649 = vsyncpa [#allocation4], 1

</llo_original>
